<compile_context>
chip_gen: v7x
topology: tpu7x:2x2x1
jax: 0.10.0
libtpu: 0.0.40
codegen_flags: <defaults>
</compile_context>

<pallas_src>
import math
from functools import partial

import jax
import jax.numpy as jnp
import numpy as np
from jax import lax
from jax.experimental import pallas as pl
from jax.experimental.pallas import tpu as pltpu


# ---------------------------------------------------------------------------
# Helpers
# ---------------------------------------------------------------------------

def _pick_tile(dim, target, align):
    """Largest legal tile <= target: the full dim if it is small, otherwise the
    largest divisor of dim that is a multiple of `align` (TPU (8,128) tiling)."""
    if dim <= target:
        return dim
    t = (target // align) * align
    while t >= align:
        if dim % t == 0:
            return t
        t -= align
    # TODO(synk): pad instead of falling back to the full (untiled) dimension.
    return dim


def _vmem_limit_bytes(pipeline_bytes, scratch_bytes=0):
    """Scoped-VMEM request: double-buffered pipeline blocks + scratch, 2x headroom,
    clamped to [32 MiB, 64 MiB] (>= default scoped limit, <= v7x physical VMEM)."""
    need = 2 * pipeline_bytes + scratch_bytes
    return int(min(max(2 * need + (4 << 20), 32 << 20), 64 << 20))


# ---------------------------------------------------------------------------
# Linear projection kernels: o = x @ W + b   (bf16 operands, f32 accumulation)
# ---------------------------------------------------------------------------

def _linear_kernel_full_k(x_ref, w_ref, b_ref, o_ref):
    # x: (tm, K)  w: (K, tn)  b: (1, tn) f32  o: (tm, tn)
    acc = jnp.dot(x_ref[...].astype(jnp.bfloat16),
                  w_ref[...].astype(jnp.bfloat16),
                  preferred_element_type=jnp.float32)
    o_ref[...] = (acc + b_ref[...]).astype(o_ref.dtype)


def _linear_kernel_k_tiled(x_ref, w_ref, b_ref, o_ref, acc_ref):
    # Fallback when K is too large for a single block: K reduction axis last.
    @pl.when(pl.program_id(2) == 0)
    def _():
        acc_ref[...] = jnp.zeros_like(acc_ref)

    acc_ref[...] += jnp.dot(x_ref[...].astype(jnp.bfloat16),
                            w_ref[...].astype(jnp.bfloat16),
                            preferred_element_type=jnp.float32)

    @pl.when(pl.program_id(2) == pl.num_programs(2) - 1)
    def _():
        o_ref[...] = (acc_ref[...] + b_ref[...]).astype(o_ref.dtype)


def linear(x2d, w, b, *, out_dtype=jnp.bfloat16,
           tm_target=512, tn_target=512, tk_target=512, tk_full_max=2048):
    """x2d: (M, K), w: (K, N) (stored pre-transposed, ideally bf16), b: (N,) f32."""
    M, K = x2d.shape
    Kw, N = w.shape
    assert K == Kw
    tm = _pick_tile(M, tm_target, 8)
    tn = _pick_tile(N, tn_target, 128)
    b2d = b.reshape(1, N).astype(jnp.float32)
    out_isz = np.dtype(out_dtype).itemsize

    if K <= tk_full_max:
        # Whole contraction in one block: no K grid axis, no accumulator scratch.
        tk = K
        pipeline_bytes = (tm * tk * x2d.dtype.itemsize + tk * tn * w.dtype.itemsize
                          + tn * 4 + tm * tn * out_isz)
        return pl.pallas_call(
            _linear_kernel_full_k,
            out_shape=jax.ShapeDtypeStruct((M, N), out_dtype),
            grid_spec=pltpu.PrefetchScalarGridSpec(
                num_scalar_prefetch=0,
                grid=(M // tm, N // tn),
                in_specs=[pl.BlockSpec((tm, tk), lambda i, j: (i, 0)),
                          pl.BlockSpec((tk, tn), lambda i, j: (0, j)),
                          pl.BlockSpec((1, tn), lambda i, j: (0, j))],
                out_specs=pl.BlockSpec((tm, tn), lambda i, j: (i, j)),
            ),
            compiler_params=pltpu.CompilerParams(
                dimension_semantics=("parallel", "parallel"),
                vmem_limit_bytes=_vmem_limit_bytes(pipeline_bytes),
            ),
        )(x2d, w, b2d)

    # Large-K fallback: tiled reduction, reduction axis last.
    tk = _pick_tile(K, tk_target, 128)
    pipeline_bytes = (tm * tk * x2d.dtype.itemsize + tk * tn * w.dtype.itemsize
                      + tn * 4 + tm * tn * out_isz)
    scratch_bytes = tm * tn * 4
    return pl.pallas_call(
        _linear_kernel_k_tiled,
        out_shape=jax.ShapeDtypeStruct((M, N), out_dtype),
        grid_spec=pltpu.PrefetchScalarGridSpec(
            num_scalar_prefetch=0,
            grid=(M // tm, N // tn, K // tk),
            in_specs=[pl.BlockSpec((tm, tk), lambda i, j, k: (i, k)),
                      pl.BlockSpec((tk, tn), lambda i, j, k: (k, j)),
                      pl.BlockSpec((1, tn), lambda i, j, k: (0, j))],
            out_specs=pl.BlockSpec((tm, tn), lambda i, j, k: (i, j)),
            scratch_shapes=[pltpu.VMEM((tm, tn), jnp.float32)],
        ),
        compiler_params=pltpu.CompilerParams(
            dimension_semantics=("parallel", "parallel", "arbitrary"),
            vmem_limit_bytes=_vmem_limit_bytes(pipeline_bytes, scratch_bytes),
        ),
    )(x2d, w, b2d)


# ---------------------------------------------------------------------------
# Flash-style multi-head attention kernel (online softmax over KV tiles)
# ---------------------------------------------------------------------------

def _flash_attention_kernel(q_ref, k_ref, v_ref, o_ref, m_sc, l_sc, acc_sc, *, h, d_k):
    # Blocks: q (1, tq, d_model), k/v (1, tkv, d_model), o (1, tq, d_model).
    # Heads live on contiguous lane slices of width d_k; scale is folded into W_q.
    kv_step = pl.program_id(2)

    @pl.when(kv_step == 0)
    def _():
        m_sc[...] = jnp.full_like(m_sc, -jnp.inf)
        l_sc[...] = jnp.zeros_like(l_sc)
        acc_sc[...] = jnp.zeros_like(acc_sc)

    q_all = q_ref[0].astype(jnp.bfloat16)      # (tq, d_model)
    k_all = k_ref[0].astype(jnp.bfloat16)      # (tkv, d_model)
    v_all = v_ref[0].astype(jnp.bfloat16)      # (tkv, d_model)

    for head in range(h):
        lo = head * d_k
        hi = lo + d_k
        q_h = q_all[:, lo:hi]                  # static lane slices, no transposes
        k_h = k_all[:, lo:hi]
        v_h = v_all[:, lo:hi]

        # scores = q @ k^T by contracting over d_k (no materialized transpose)
        s = lax.dot_general(q_h, k_h, (((1,), (1,)), ((), ())),
                            preferred_element_type=jnp.float32)     # (tq, tkv) f32

        m_prev = m_sc[:, head:head + 1]                              # (tq, 1)
        m_new = jnp.maximum(m_prev, jnp.max(s, axis=-1, keepdims=True))
        alpha = jnp.exp(m_prev - m_new)
        p = jnp.exp(s - m_new)                                       # f32 softmax numerator
        l_sc[:, head:head + 1] = alpha * l_sc[:, head:head + 1] + \
            jnp.sum(p, axis=-1, keepdims=True)
        acc_sc[:, lo:hi] = alpha * acc_sc[:, lo:hi] + jnp.dot(
            p.astype(jnp.bfloat16), v_h, preferred_element_type=jnp.float32)
        m_sc[:, head:head + 1] = m_new

    @pl.when(kv_step == pl.num_programs(2) - 1)
    def _():
        for head in range(h):
            lo = head * d_k
            hi = lo + d_k
            inv_l = pl.reciprocal(l_sc[:, head:head + 1], approx=False)
            acc_sc[:, lo:hi] = acc_sc[:, lo:hi] * inv_l
        # single full-width, lane-dense store of all heads
        o_ref[0] = acc_sc[...].astype(o_ref.dtype)


def mha_attention(q, k, v, h, d_k, *, col_blocks=(0, 0, 0), out_dtype=jnp.bfloat16):
    """q/k/v: (B, S, *) arrays whose selected d_model-wide column block holds the
    heads concatenated on the lane axis. col_blocks picks the column block per
    operand (used to read Q/K/V straight out of a fused QKV activation)."""
    B, S, _ = q.shape
    d_model = h * d_k
    tq = _pick_tile(S, 256, 8)
    tkv = _pick_tile(S, 512, 8)
    qc, kc, vc = col_blocks

    q_spec = pl.BlockSpec((1, tq, d_model), lambda b, qi, ki: (b, qi, qc))
    k_spec = pl.BlockSpec((1, tkv, d_model), lambda b, qi, ki: (b, ki, kc))
    v_spec = pl.BlockSpec((1, tkv, d_model), lambda b, qi, ki: (b, ki, vc))
    o_spec = pl.BlockSpec((1, tq, d_model), lambda b, qi, ki: (b, qi, 0))

    pipeline_bytes = (tq * d_model * q.dtype.itemsize
                      + tkv * d_model * k.dtype.itemsize
                      + tkv * d_model * v.dtype.itemsize
                      + tq * d_model * np.dtype(out_dtype).itemsize)
    scratch_bytes = 4 * (2 * tq * h + tq * d_model)

    return pl.pallas_call(
        partial(_flash_attention_kernel, h=h, d_k=d_k),
        out_shape=jax.ShapeDtypeStruct((B, S, d_model), out_dtype),
        grid_spec=pltpu.PrefetchScalarGridSpec(
            num_scalar_prefetch=0,
            grid=(B, S // tq, S // tkv),       # online-softmax (KV) reduction axis last
            in_specs=[q_spec, k_spec, v_spec],
            out_specs=o_spec,
            scratch_shapes=[pltpu.VMEM((tq, h), jnp.float32),        # running max m
                            pltpu.VMEM((tq, h), jnp.float32),        # running sum l
                            pltpu.VMEM((tq, d_model), jnp.float32)],  # output accumulator
        ),
        compiler_params=pltpu.CompilerParams(
            dimension_semantics=("parallel", "parallel", "arbitrary"),
            vmem_limit_bytes=_vmem_limit_bytes(pipeline_bytes, scratch_bytes),
        ),
    )(q, k, v)


# ---------------------------------------------------------------------------
# MultiHeadedAttention module (JAX wrapper around the Pallas kernels)
# ---------------------------------------------------------------------------

class MultiHeadedAttention:
    def __init__(self, h, d_model, key, dropout=0.1):
        assert d_model % h == 0
        self.h = h
        self.d_k = d_model // h
        self.d_model = d_model
        self.dropout_p = dropout  # TODO(synk): identity at eval; train-mode dropout not implemented.

        # 4 Linear(d_model, d_model) layers, PyTorch default init:
        # U(-1/sqrt(in_features), 1/sqrt(in_features)) for weight and bias.
        bound = 1.0 / math.sqrt(d_model)
        keys = jax.random.split(key, 8)
        self.weights = []   # reference (f32) params, stored as (in, out) == W^T
        self.biases = []
        for i in range(4):
            w = jax.random.uniform(keys[2 * i], (d_model, d_model), jnp.float32, -bound, bound)
            b = jax.random.uniform(keys[2 * i + 1], (d_model,), jnp.float32, -bound, bound)
            self.weights.append(w)
            self.biases.append(b)

        # Kernel-side parameters:
        #   * 1/sqrt(d_k) folded into the Q projection (free constant fold),
        #   * weights in bf16 (MXU operands), biases stay f32,
        #   * fused QKV weight for the self-attention fast path.
        scale = 1.0 / math.sqrt(self.d_k)
        w_q_scaled = self.weights[0] * scale
        b_q_scaled = self.biases[0] * scale
        self.w_q = w_q_scaled.astype(jnp.bfloat16)
        self.w_k = self.weights[1].astype(jnp.bfloat16)
        self.w_v = self.weights[2].astype(jnp.bfloat16)
        self.w_o = self.weights[3].astype(jnp.bfloat16)
        self.b_q = b_q_scaled
        self.b_k = self.biases[1]
        self.b_v = self.biases[2]
        self.b_o = self.biases[3]
        self.w_qkv = jnp.concatenate(
            [w_q_scaled, self.weights[1], self.weights[2]], axis=1).astype(jnp.bfloat16)
        self.b_qkv = jnp.concatenate([b_q_scaled, self.biases[1], self.biases[2]])

    def __call__(self, query, key, value, mask=None):
        if mask is not None:
            # TODO(synk): attention-mask path not implemented.
            raise NotImplementedError("mask is not supported by the Pallas kernels")
        B, S, d_model = query.shape
        assert d_model == self.d_model

        if (query is key) and (key is value):
            # Self-attention: fused QKV projection (one pallas_call, x read once).
            qkv = linear(query.reshape(B * S, d_model), self.w_qkv, self.b_qkv,
                         out_dtype=jnp.bfloat16).reshape(B, S, 3 * d_model)
            if d_model % 128 == 0:
                # Read Q/K/V column blocks straight out of the fused activation.
                x = mha_attention(qkv, qkv, qkv, self.h, self.d_k, col_blocks=(0, 1, 2))
            else:
                q = qkv[..., :d_model]
                k = qkv[..., d_model:2 * d_model]
                v = qkv[..., 2 * d_model:]
                x = mha_attention(q, k, v, self.h, self.d_k)
        else:
            def proj(xx, w, b):
                return linear(xx.reshape(B * S, d_model), w, b,
                              out_dtype=jnp.bfloat16).reshape(B, S, d_model)
            q = proj(query, self.w_q, self.b_q)
            k = proj(key, self.w_k, self.b_k)
            v = proj(value, self.w_v, self.b_v)
            x = mha_attention(q, k, v, self.h, self.d_k)

        out = linear(x.reshape(B * S, d_model), self.w_o, self.b_o, out_dtype=jnp.float32)
        return out.reshape(B, S, d_model)


# ---------------------------------------------------------------------------
# Pure-JAX f32 reference (matches the PyTorch forward at eval time, mask=None)
# ---------------------------------------------------------------------------

def reference_mha(mha, query, key, value):
    B, S, _ = query.shape

    def proj(x, w, b):
        y = x @ w + b
        return jnp.transpose(y.reshape(B, S, mha.h, mha.d_k), (0, 2, 1, 3))

    q = proj(query, mha.weights[0], mha.biases[0])
    k = proj(key, mha.weights[1], mha.biases[1])
    v = proj(value, mha.weights[2], mha.biases[2])
    scores = jnp.einsum("bhqd,bhkd->bhqk", q, k) / math.sqrt(mha.d_k)
    p = jax.nn.softmax(scores, axis=-1)
    x = jnp.einsum("bhqk,bhkd->bhqd", p, v)
    x = jnp.transpose(x, (0, 2, 1, 3)).reshape(B, S, mha.d_model)
    return x @ mha.weights[3] + mha.biases[3]


if __name__ == "__main__":
    B, S, H, D_MODEL = 2, 8, 4, 128   # d_k = 32

    root = jax.random.PRNGKey(0)
    k_params, k_q, k_k, k_v = jax.random.split(root, 4)

    mha = MultiHeadedAttention(H, D_MODEL, k_params)

    query = jax.random.normal(k_q, (B, S, D_MODEL), jnp.float32)
    key = jax.random.normal(k_k, (B, S, D_MODEL), jnp.float32)
    value = jax.random.normal(k_v, (B, S, D_MODEL), jnp.float32)

    # bf16 MXU operands (f32 accumulation) + bf16 intermediate activations, so
    # compare against the f32 reference with a bf16-appropriate tolerance.
    tol = dict(rtol=5e-2, atol=5e-2)

    # Cross-attention path (distinct tensors -> separate Q/K/V projections).
    out = jax.block_until_ready(mha(query, key, value))
    ref = reference_mha(mha, query, key, value)
    np.testing.assert_allclose(np.asarray(out, dtype=np.float32),
                               np.asarray(ref, dtype=np.float32), **tol)

    # Self-attention path (fused QKV projection + in-place column indexing).
    out_self = jax.block_until_ready(mha(query, query, query))
    ref_self = reference_mha(mha, query, query, query)
    np.testing.assert_allclose(np.asarray(out_self, dtype=np.float32),
                               np.asarray(ref_self, dtype=np.float32), **tol)

    print("KERNEL_OK")
</pallas_src>

<mosaic_0001>
module attributes {stable_mosaic.version = 11 : i64} {
  func.func @_linear_kernel_full_k(%arg0: i32, %arg1: i32, %arg2: memref<16x128xf32, #tpu.memory_space<vmem>>, %arg3: memref<128x128xbf16, #tpu.memory_space<vmem>>, %arg4: memref<1x128xf32, #tpu.memory_space<vmem>>, %arg5: memref<16x128xbf16, #tpu.memory_space<vmem>>) attributes {dimension_semantics = [#tpu.dimension_semantics<parallel>, #tpu.dimension_semantics<parallel>], iteration_bounds = array<i64: 1, 1>, scalar_prefetch = 0 : i64, scratch_operands = 0 : i64, tpu.core_type = #tpu.core_type<tc>, window_params = [{transform_indices = @transform_0, window_bounds = array<i64: 16, 128>}, {transform_indices = @transform_1, window_bounds = array<i64: 128, 128>}, {transform_indices = @transform_2, window_bounds = array<i64: 1, 128>}, {transform_indices = @transform_3, window_bounds = array<i64: 16, 128>}]} {
    %c0 = arith.constant 0 : index
    %c0_0 = arith.constant 0 : index
    %0 = vector.load %arg2[%c0, %c0_0] : memref<16x128xf32, #tpu.memory_space<vmem>>, vector<16x128xf32>
    %1 = arith.truncf %0 : vector<16x128xf32> to vector<16x128xbf16>
    %c0_1 = arith.constant 0 : index
    %c0_2 = arith.constant 0 : index
    %2 = vector.load %arg3[%c0_1, %c0_2] : memref<128x128xbf16, #tpu.memory_space<vmem>>, vector<128x128xbf16>
    %cst = arith.constant dense<0.000000e+00> : vector<16x128xf32>
    %3 = tpu.matmul %1, %2, %cst {dimension_numbers = #tpu.dot_dimension_numbers<[1], [0], [0], [1], [0, 0, 1, 1], [], []>} : vector<16x128xbf16>, vector<128x128xbf16>, vector<16x128xf32> -> vector<16x128xf32>
    %c0_3 = arith.constant 0 : index
    %c0_4 = arith.constant 0 : index
    %4 = vector.load %arg4[%c0_3, %c0_4] : memref<1x128xf32, #tpu.memory_space<vmem>>, vector<1x128xf32>
    %5 = vector.broadcast %4 : vector<1x128xf32> to vector<16x128xf32>
    %6 = arith.addf %3, %5 : vector<16x128xf32>
    %7 = arith.truncf %6 : vector<16x128xf32> to vector<16x128xbf16>
    %c0_5 = arith.constant 0 : index
    %c0_6 = arith.constant 0 : index
    %8 = vector.load %arg5[%c0_5, %c0_6] : memref<16x128xbf16, #tpu.memory_space<vmem>>, vector<16x128xbf16>
    tpu.vector_store %arg5[%c0_5, %c0_6], %7 {strides = array<i32>} : memref<16x128xbf16, #tpu.memory_space<vmem>>, vector<16x128xbf16>,
    return
  }
  func.func @transform_0(%arg0: i32, %arg1: i32) -> (i32, i32) {
    %c0_i32 = arith.constant 0 : i32
    %c0_i32_0 = arith.constant 0 : i32
    return %arg0, %c0_i32 : i32, i32
  }
  func.func @transform_1(%arg0: i32, %arg1: i32) -> (i32, i32) {
    %c0_i32 = arith.constant 0 : i32
    %c0_i32_0 = arith.constant 0 : i32
    return %c0_i32, %arg1 : i32, i32
  }
  func.func @transform_2(%arg0: i32, %arg1: i32) -> (i32, i32) {
    %c0_i32 = arith.constant 0 : i32
    %c0_i32_0 = arith.constant 0 : i32
    return %c0_i32, %arg1 : i32, i32
  }
  func.func @transform_3(%arg0: i32, %arg1: i32) -> (i32, i32) {
    %c0_i32 = arith.constant 0 : i32
    return %arg0, %arg1 : i32, i32
  }
}

</mosaic_0001>

<llo_original>
// kernel: tpu_custom_call.1
$region0: #{tpu_custom_call.1}
  #allocation0 [shape = 'u32[]', space=smem, size = 0x4, offset = 0x4, fixed_abs, tag = 'smem constant byte address 0x4 - core index']
  #allocation1 [shape = 'u32[144,128]{1,0:T(1,128)}', space=vmem, size = 0x12000, scoped, tag = 'internal scratch']
  %s0 = inlined_call_operand.hbm [shape: f32[16,128], index: 0, kind: input, shape index: {}]
  %s1 = inlined_call_operand.hbm [shape: bf16[128,128], index: 1, kind: input, shape index: {}]
  %s2 = inlined_call_operand.vmem [shape: f32[1,128], index: 2, kind: input, shape index: {}]
  %s3 = inlined_call_operand.hbm [shape: bf16[16,128], index: 3, kind: output, shape index: {}]
  %s4 = sld [smem:[#allocation0]]
  $region30: #{tpu_custom_call.1} parent=0
    _
  %s6 = ssub.s32 1, %s4
  %s7 = scalar_select 0, %s6, %s4
  $region1: #{tpu_custom_call.1} parent=0
    #allocation2 [shape = 'u8[8192]{0}', space=vmem, size = 0x2000, scoped, tag = 'input window, operand 0, single buffered']
    #allocation3 [shape = 's32[1]{0}', space=sflag, size = 0x4, scoped, tag = 'scoped memory for tpu_custom_call.1']
    #allocation4 [shape = 's32[1]{0}', space=sflag, size = 0x4, scoped, tag = 'scoped memory for tpu_custom_call.1']
    #allocation5 [shape = 'u8[32768]{0}', space=vmem, size = 0x8000, scoped, tag = 'input window, operand 1, single buffered']
    #allocation6 [shape = 's32[1]{0}', space=sflag, size = 0x4, scoped, tag = 'scoped memory for tpu_custom_call.1']
    #allocation7 [shape = 'u8[4096]{0}', space=vmem, size = 0x1000, scoped, tag = 'output window, operand 0, single buffered']
    %8 = vsyncpa [#allocation3], 0
    %9 = vsyncpa [#allocation6], 0
    %10 = vsyncpa [#allocation4], 0
    // Predicated region
    $region2: #{tpu_custom_call.1} parent=1 // pred_check
      _
    $region3: #{tpu_custom_call.1} parent=1 // pred_check_branch
      %12 = sbr.rel (0) target = $region5
    $region4: #{tpu_custom_call.1} parent=1 // pred_region
      %s14 = ssub.s32 256, 256
      %15 = vsyncadd [#allocation3], %s14
      %s16 = sshll.u32 [#allocation2], 4
      %s17 = int_to_ptr.vmem [resolvable:$true] %s16
      %22 = dma.hbm_to_vmem [thread:$0]  %s0, 256, %s17, [#allocation3], 128, 128, 8
    $region5: #{tpu_custom_call.1} parent=1 // pred_fallthru
      _
    // Predicated region
    $region6: #{tpu_custom_call.1} parent=1 // pred_check
      _
    $region7: #{tpu_custom_call.1} parent=1 // pred_check_branch
      %24 = sbr.rel (0) target = $region9
    $region8: #{tpu_custom_call.1} parent=1 // pred_region
      %s26 = ssub.s32 1024, 1024
      %27 = vsyncadd [#allocation6], %s26
      %s28 = sshll.u32 [#allocation5], 4
      %s29 = int_to_ptr.vmem [resolvable:$true] %s28
      %34 = dma.hbm_to_vmem [thread:$0]  %s1, 1024, %s29, [#allocation6], 64, 64, 4
    $region9: #{tpu_custom_call.1} parent=1 // pred_fallthru
      _
    // Predicated region
    $region10: #{tpu_custom_call.1} parent=1 // pred_check
      _
    $region11: #{tpu_custom_call.1} parent=1 // pred_check_branch
      %36 = sbr.rel (0) target = $region13
    $region12: #{tpu_custom_call.1} parent=1 // pred_region
      _
    $region13: #{tpu_custom_call.1} parent=1 // pred_fallthru
      _
    // Predicated region
    $region14: #{tpu_custom_call.1} parent=1 // pred_check
      _
    $region15: #{tpu_custom_call.1} parent=1 // pred_check_branch
      %38 = sbr.rel (0) target = $region17
    $region16: #{tpu_custom_call.1} parent=1 // pred_region
      %39 = dma.done [#allocation3], 256
    $region17: #{tpu_custom_call.1} parent=1 // pred_fallthru
      _
    // Predicated region
    $region18: #{tpu_custom_call.1} parent=1 // pred_check
      _
    $region19: #{tpu_custom_call.1} parent=1 // pred_check_branch
      %41 = sbr.rel (0) target = $region21
    $region20: #{tpu_custom_call.1} parent=1 // pred_region
      %42 = dma.done [#allocation6], 1024
    $region21: #{tpu_custom_call.1} parent=1 // pred_fallthru
      _
    %v44 = vld [vmem:[#allocation2] sm:$0xff]
    %v45 = vld [vmem:[#allocation2 + $0x8] sm:$0xff]
    %v46 = vpack.c.bf16 %v45, %v44
    %v47 = vld [vmem:[#allocation5] sm:$0xf]
    %v48 = vld [vmem:[#allocation5 + $0x4] sm:$0xf]
    %v49 = vld [vmem:[#allocation5 + $0x8] sm:$0xf]
    %v50 = vld [vmem:[#allocation5 + $0xc] sm:$0xf]
    %v51 = vld [vmem:[#allocation5 + $0x10] sm:$0xf]
    %v52 = vld [vmem:[#allocation5 + $0x14] sm:$0xf]
    %v53 = vld [vmem:[#allocation5 + $0x18] sm:$0xf]
    %v54 = vld [vmem:[#allocation5 + $0x1c] sm:$0xf]
    %v55 = vld [vmem:[#allocation5 + $0x20] sm:$0xf]
    %v56 = vld [vmem:[#allocation5 + $0x24] sm:$0xf]
    %v57 = vld [vmem:[#allocation5 + $0x28] sm:$0xf]
    %v58 = vld [vmem:[#allocation5 + $0x2c] sm:$0xf]
    %v59 = vld [vmem:[#allocation5 + $0x30] sm:$0xf]
    %v60 = vld [vmem:[#allocation5 + $0x34] sm:$0xf]
    %v61 = vld [vmem:[#allocation5 + $0x38] sm:$0xf]
    %v62 = vld [vmem:[#allocation5 + $0x3c] sm:$0xf]
    %v63 = vld [vmem:[%s2] sm:$0x1]
    %v65 = vlaneseq
    %v66 = vshrl.u32 %v65, 7
    %v67 = vsub.s32 0, %v66
    %v68 = vrot.slane %v63, %v67
    %v86 = vunpack.c.l.b16 %v47
    %v87 = vunpack.c.l.b16 %v48
    %v88 = vunpack.c.l.b16 %v49
    %v89 = vunpack.c.l.b16 %v50
    %v90 = vunpack.c.l.b16 %v51
    %v91 = vunpack.c.l.b16 %v52
    %v92 = vunpack.c.l.b16 %v53
    %v93 = vunpack.c.l.b16 %v54
    %v94 = vunpack.c.l.b16 %v55
    %v95 = vunpack.c.l.b16 %v56
    %v96 = vunpack.c.l.b16 %v57
    %v97 = vunpack.c.l.b16 %v58
    %v98 = vunpack.c.l.b16 %v59
    %v99 = vunpack.c.l.b16 %v60
    %v100 = vunpack.c.l.b16 %v61
    %v101 = vunpack.c.l.b16 %v62
    %v102 = vpack.c.b16 %v87, %v86
    %v103 = vpack.c.b16 %v89, %v88
    %v104 = vpack.c.b16 %v91, %v90
    %v105 = vpack.c.b16 %v93, %v92
    %v106 = vpack.c.b16 %v95, %v94
    %v107 = vpack.c.b16 %v97, %v96
    %v108 = vpack.c.b16 %v99, %v98
    %v109 = vpack.c.b16 %v101, %v100
    %118 = vmatprep.subr.bf16.mxu0 0
    %119 = vmatpush1.bf16.msra.mxu0 %v102
    %120 = vmatprep.subr.bf16.mxu0 0
    %121 = vmatpush1.bf16.msra.mxu0 %v103
    %122 = vmatprep.subr.bf16.mxu0 0
    %123 = vmatpush1.bf16.msra.mxu0 %v104
    %124 = vmatprep.subr.bf16.mxu0 0
    %125 = vmatpush1.bf16.msra.mxu0 %v105
    %126 = vmatprep.subr.bf16.mxu0 0
    %127 = vmatpush1.bf16.msra.mxu0 %v106
    %128 = vmatprep.subr.bf16.mxu0 0
    %129 = vmatpush1.bf16.msra.mxu0 %v107
    %130 = vmatprep.subr.bf16.mxu0 0
    %131 = vmatpush1.bf16.msra.mxu0 %v108
    %132 = vmatprep.subr.bf16.mxu0 0
    %133 = vmatpush1.bf16.msra.mxu0 %v109
    %134 = vmatprep.subr.bf16.mxu0 0
    %135 = vmatpush1.bf16.msra.mxu0 0
    %136 = vmatprep.subr.bf16.mxu0 0
    %137 = vmatpush1.bf16.msra.mxu0 0
    %138 = vmatprep.subr.bf16.mxu0 0
    %139 = vmatpush1.bf16.msra.mxu0 0
    %140 = vmatprep.subr.bf16.mxu0 0
    %141 = vmatpush1.bf16.msra.mxu0 0
    %142 = vmatprep.subr.bf16.mxu0 0
    %143 = vmatpush1.bf16.msra.mxu0 0
    %144 = vmatprep.subr.bf16.mxu0 0
    %145 = vmatpush1.bf16.msra.mxu0 0
    %146 = vmatprep.subr.bf16.mxu0 0
    %147 = vmatpush1.bf16.msra.mxu0 0
    %148 = vmatprep.subr.bf16.mxu0 0
    %149 = vmatpush1.bf16.msra.mxu0 0
    %150 = vmatprep.mubr.bf16.mxu0 0
    %151 = vmatmul.mubr.bf16.gmra.mrb[0].mxu0 %v46
    %v152 = vpop.f32.mrb[0].mxu0
    %v153 = vadd.f32 %v68, %v152
    %v154 = vpop.f32.mrb[0].mxu0
    %v155 = vpop.f32.mrb[0].mxu0
    %v156 = vadd.f32 %v68, %v155
    %v157 = vpop.f32.mrb[0].mxu0
    %158 = vdwg.mxu0
    %v159 = vpack.c.bf16 %v156, %v153
    %v161 = vunpack.c.l.b16 %v159
    %v162 = vunpack.c.h.b16 %v159
    %v163 = vpack.c.b16 %v161, %v161
    %v164 = vpack.c.b16 %v162, %v162
    %167 = vst [vmem:[#allocation7] sm:$0xf] %v163
    %168 = vst [vmem:[#allocation7 + $0x4] sm:$0xf] %v164
    // Predicated region
    $region22: #{tpu_custom_call.1} parent=1 // pred_check
      _
    $region23: #{tpu_custom_call.1} parent=1 // pred_check_branch
      %170 = sbr.rel (0) target = $region25
    $region24: #{tpu_custom_call.1} parent=1 // pred_region
      %s172 = ssub.s32 128, 128
      %173 = vsyncadd [#allocation4], %s172
      %s174 = sshll.u32 [#allocation7], 4
      %s175 = int_to_ptr.vmem [resolvable:$true] %s174
      %180 = dma.vmem_to_hbm [thread:$0]  %s175, 128, %s3, [#allocation4], 64, 64, 4
    $region25: #{tpu_custom_call.1} parent=1 // pred_fallthru
      _
    // Predicated region
    $region26: #{tpu_custom_call.1} parent=1 // pred_check
      _
    $region27: #{tpu_custom_call.1} parent=1 // pred_check_branch
      %182 = sbr.rel (0) target = $region29
    $region28: #{tpu_custom_call.1} parent=1 // pred_region
      %183 = dma.done [#allocation4], 128
    $region29: #{tpu_custom_call.1} parent=1 // pred_fallthru
      _
    %184 = vsyncpa [#allocation3], 1
    %185 = vsyncpa [#allocation6], 1
    %186 = vsyncpa [#allocation4], 1

</llo_original>
